<compile_context>
chip_gen: v5e
topology: v5e:2x2
jax: 0.10.0
libtpu: 0.0.40
codegen_flags: <defaults>
</compile_context>

<pallas_src>
import functools

import jax
import jax.numpy as jnp
from jax.experimental import pallas as pl
from jax.experimental.pallas import tpu as pltpu

LANE = 128
SUBLANE = 8


def _round_up(x, m):
    return ((x + m - 1) // m) * m


# ----------------------------------------------------------------------------
# Fused MLP kernel: chains all layers on one (TM, D) batch tile.
# refs layout: x, w1, b1, w2, b2, ..., wn, bn, out1, out2, ..., outn
# ----------------------------------------------------------------------------
def _fused_mlp_kernel(*refs, num_layers):
    x_ref = refs[0]
    layer_refs = refs[1:1 + 2 * num_layers]
    out_refs = refs[1 + 2 * num_layers:]

    h = x_ref[...]  # (TM, Din_pad) f32, stays on-chip for the whole chain
    for i in range(num_layers):
        w_ref = layer_refs[2 * i]
        b_ref = layer_refs[2 * i + 1]
        y = jnp.dot(h, w_ref[...], preferred_element_type=jnp.float32)
        y = y + b_ref[...]                      # (1, Dout_pad) broadcast, once
        if i != num_layers - 1:
            y = jnp.maximum(y, 0.0)             # ReLU (VPU, fused)
            # TODO(synk): nn.Dropout is implemented as identity (eval mode /
            # p=0.0); training-mode random masking is not implemented here.
        out_refs[i][...] = y.astype(out_refs[i].dtype)
        h = y


# ----------------------------------------------------------------------------
# Parameter construction (mirrors Linear.__init__)
# ----------------------------------------------------------------------------
def make_linear_params(key, model_params):
    number_of_layers = model_params["number_of_layers"]
    input_dim = model_params["input_dim"]
    hidden_dim = model_params["hidden_dim"]
    output_dim = model_params["output_dim"]

    if isinstance(hidden_dim, list):
        assert len(hidden_dim) + 1 == number_of_layers
    else:
        hidden_dim = [hidden_dim for _ in range(number_of_layers - 1)]
    dims = [input_dim] + hidden_dim + [output_dim]

    weights, biases = [], []
    keys = jax.random.split(key, number_of_layers)
    for i in range(number_of_layers):
        din, dout = dims[i], dims[i + 1]
        kw, kb = jax.random.split(keys[i])
        bound = 1.0 / float(jnp.sqrt(din))      # nn.Linear default init range
        w = jax.random.uniform(kw, (din, dout), jnp.float32, -bound, bound)
        b = jax.random.uniform(kb, (dout,), jnp.float32, -bound, bound)

        # Zero-pad to lane-aligned shapes (lane-dense outputs, aligned MXU K).
        din_p = _round_up(din, LANE)
        dout_p = _round_up(dout, LANE)
        w_p = jnp.zeros((din_p, dout_p), jnp.float32).at[:din, :dout].set(w)
        b_p = jnp.zeros((1, dout_p), jnp.float32).at[0, :dout].set(b)
        weights.append(w_p)
        biases.append(b_p)

    return {"weights": weights, "biases": biases, "dims": dims,
            "dropout": model_params.get("dropout", 0.0)}


# ----------------------------------------------------------------------------
# Forward (mirrors Linear.forward) — ONE pallas_call for the whole MLP
# ----------------------------------------------------------------------------
def mlp_forward(params, x):
    ws, bs, dims = params["weights"], params["biases"], params["dims"]
    n = len(ws)
    B, din = x.shape
    assert din == dims[0]

    # Pad batch (sublane) and features (lane); pick a batch tile size.
    if B > 128:
        b_pad = _round_up(B, 128)
        tm = 128
    else:
        b_pad = _round_up(B, SUBLANE)
        tm = b_pad
    din_pad = ws[0].shape[0]
    x_pad = jnp.zeros((b_pad, din_pad), x.dtype).at[:B, :din].set(x)

    in_specs = [pl.BlockSpec((tm, din_pad), lambda i: (i, 0))]
    flat_wb = []
    out_shapes, out_specs = [], []
    for w, b in zip(ws, bs):
        # Full (padded) weight/bias resident in VMEM; constant index_map so
        # the pipeline does not re-DMA them per batch tile.
        in_specs.append(pl.BlockSpec(w.shape, lambda i: (0, 0)))
        in_specs.append(pl.BlockSpec(b.shape, lambda i: (0, 0)))
        flat_wb.extend((w, b))
        dout_p = w.shape[1]
        out_shapes.append(jax.ShapeDtypeStruct((b_pad, dout_p), x.dtype))
        out_specs.append(pl.BlockSpec((tm, dout_p), lambda i: (i, 0)))

    kernel = functools.partial(_fused_mlp_kernel, num_layers=n)
    outs = pl.pallas_call(
        kernel,
        out_shape=tuple(out_shapes),
        grid=(b_pad // tm,),
        in_specs=in_specs,
        out_specs=tuple(out_specs),
        compiler_params=pltpu.CompilerParams(
            dimension_semantics=("parallel",)),
    )(x_pad, *flat_wb)

    # Slice the real rows/columns back out (padding is wrapper-side only).
    all_outputs = [o[:B, :dims[i + 1]] for i, o in enumerate(outs)]
    return all_outputs[-1], all_outputs


# ----------------------------------------------------------------------------
# Pure-JAX reference (for correctness check)
# ----------------------------------------------------------------------------
def mlp_reference(params, x):
    ws, bs, dims = params["weights"], params["biases"], params["dims"]
    n = len(ws)
    h = x
    outs = []
    for i, (w, b) in enumerate(zip(ws, bs)):
        w_l = w[:dims[i], :dims[i + 1]]
        b_l = b[0, :dims[i + 1]]
        h = jnp.dot(h, w_l, preferred_element_type=jnp.float32) + b_l
        if i != n - 1:
            h = jnp.maximum(h, 0.0)
        outs.append(h)
    return h, outs


# ----------------------------------------------------------------------------
# Main
# ----------------------------------------------------------------------------
if __name__ == "__main__":
    key = jax.random.PRNGKey(0)
    k_param, k_x = jax.random.split(key)

    model_params = {
        "number_of_layers": 3,
        "input_dim": 32,
        "hidden_dim": [64, 32],   # list form: len(hidden) + 1 == n_layers
        "output_dim": 4,
        "dropout": 0.0,           # dropout is identity in this forward
    }
    params = make_linear_params(k_param, model_params)

    B = 8
    x = jax.random.normal(k_x, (B, model_params["input_dim"]), jnp.float32)

    y, all_outputs = mlp_forward(params, x)
    y = jax.block_until_ready(y)

    # Shape checks (match Linear.forward: (last_output, all_outputs))
    assert y.shape == (B, model_params["output_dim"])
    assert len(all_outputs) == model_params["number_of_layers"]
    assert all_outputs[0].shape == (B, 64)
    assert all_outputs[1].shape == (B, 32)
    assert all_outputs[2].shape == (B, 4)

    # Numerical check against pure-JAX reference
    y_ref, outs_ref = mlp_reference(params, x)
    for o, r in zip(all_outputs, outs_ref):
        assert float(jnp.max(jnp.abs(o - r))) < 1e-2, "mismatch vs reference"

    print("KERNEL_OK")
</pallas_src>

<mosaic_0001>
module attributes {stable_mosaic.version = 11 : i64} {
  func.func @_fused_mlp_kernel(%arg0: i32, %arg1: memref<8x128xf32, #tpu.memory_space<vmem>>, %arg2: memref<128x128xf32, #tpu.memory_space<vmem>>, %arg3: memref<1x128xf32, #tpu.memory_space<vmem>>, %arg4: memref<128x128xf32, #tpu.memory_space<vmem>>, %arg5: memref<1x128xf32, #tpu.memory_space<vmem>>, %arg6: memref<128x128xf32, #tpu.memory_space<vmem>>, %arg7: memref<1x128xf32, #tpu.memory_space<vmem>>, %arg8: memref<8x128xf32, #tpu.memory_space<vmem>>, %arg9: memref<8x128xf32, #tpu.memory_space<vmem>>, %arg10: memref<8x128xf32, #tpu.memory_space<vmem>>) attributes {dimension_semantics = [#tpu.dimension_semantics<parallel>], iteration_bounds = array<i64: 1>, scalar_prefetch = 0 : i64, scratch_operands = 0 : i64, tpu.core_type = #tpu.core_type<tc>, window_params = [{transform_indices = @transform_0, window_bounds = array<i64: 8, 128>}, {pipeline_mode = #tpu.pipeline_mode<synchronous>, transform_indices = @transform_1, window_bounds = array<i64: 128, 128>}, {pipeline_mode = #tpu.pipeline_mode<synchronous>, transform_indices = @transform_2, window_bounds = array<i64: 1, 128>}, {pipeline_mode = #tpu.pipeline_mode<synchronous>, transform_indices = @transform_3, window_bounds = array<i64: 128, 128>}, {pipeline_mode = #tpu.pipeline_mode<synchronous>, transform_indices = @transform_4, window_bounds = array<i64: 1, 128>}, {pipeline_mode = #tpu.pipeline_mode<synchronous>, transform_indices = @transform_5, window_bounds = array<i64: 128, 128>}, {pipeline_mode = #tpu.pipeline_mode<synchronous>, transform_indices = @transform_6, window_bounds = array<i64: 1, 128>}, {transform_indices = @transform_7, window_bounds = array<i64: 8, 128>}, {transform_indices = @transform_8, window_bounds = array<i64: 8, 128>}, {transform_indices = @transform_9, window_bounds = array<i64: 8, 128>}]} {
    %c0 = arith.constant 0 : index
    %c0_0 = arith.constant 0 : index
    %0 = vector.load %arg1[%c0, %c0_0] : memref<8x128xf32, #tpu.memory_space<vmem>>, vector<8x128xf32>
    %c0_1 = arith.constant 0 : index
    %c0_2 = arith.constant 0 : index
    %1 = vector.load %arg2[%c0_1, %c0_2] : memref<128x128xf32, #tpu.memory_space<vmem>>, vector<128x128xf32>
    %cst = arith.constant dense<0.000000e+00> : vector<8x128xf32>
    %2 = tpu.matmul %0, %1, %cst {dimension_numbers = #tpu.dot_dimension_numbers<[1], [0], [0], [1], [0, 0, 1, 1], [], []>} : vector<8x128xf32>, vector<128x128xf32>, vector<8x128xf32> -> vector<8x128xf32>
    %c0_3 = arith.constant 0 : index
    %c0_4 = arith.constant 0 : index
    %3 = vector.load %arg3[%c0_3, %c0_4] : memref<1x128xf32, #tpu.memory_space<vmem>>, vector<1x128xf32>
    %4 = vector.broadcast %3 : vector<1x128xf32> to vector<8x128xf32>
    %5 = arith.addf %2, %4 : vector<8x128xf32>
    %cst_5 = arith.constant 0.000000e+00 : f32
    %6 = vector.broadcast %cst_5 : f32 to vector<8x128xf32>
    %7 = arith.maximumf %5, %6 : vector<8x128xf32>
    %c0_6 = arith.constant 0 : index
    %c0_7 = arith.constant 0 : index
    %8 = vector.load %arg8[%c0_6, %c0_7] : memref<8x128xf32, #tpu.memory_space<vmem>>, vector<8x128xf32>
    tpu.vector_store %arg8[%c0_6, %c0_7], %7 {strides = array<i32>} : memref<8x128xf32, #tpu.memory_space<vmem>>, vector<8x128xf32>,
    %c0_8 = arith.constant 0 : index
    %c0_9 = arith.constant 0 : index
    %9 = vector.load %arg4[%c0_8, %c0_9] : memref<128x128xf32, #tpu.memory_space<vmem>>, vector<128x128xf32>
    %cst_10 = arith.constant dense<0.000000e+00> : vector<8x128xf32>
    %10 = tpu.matmul %7, %9, %cst_10 {dimension_numbers = #tpu.dot_dimension_numbers<[1], [0], [0], [1], [0, 0, 1, 1], [], []>} : vector<8x128xf32>, vector<128x128xf32>, vector<8x128xf32> -> vector<8x128xf32>
    %c0_11 = arith.constant 0 : index
    %c0_12 = arith.constant 0 : index
    %11 = vector.load %arg5[%c0_11, %c0_12] : memref<1x128xf32, #tpu.memory_space<vmem>>, vector<1x128xf32>
    %12 = vector.broadcast %11 : vector<1x128xf32> to vector<8x128xf32>
    %13 = arith.addf %10, %12 : vector<8x128xf32>
    %cst_13 = arith.constant 0.000000e+00 : f32
    %14 = vector.broadcast %cst_13 : f32 to vector<8x128xf32>
    %15 = arith.maximumf %13, %14 : vector<8x128xf32>
    %c0_14 = arith.constant 0 : index
    %c0_15 = arith.constant 0 : index
    %16 = vector.load %arg9[%c0_14, %c0_15] : memref<8x128xf32, #tpu.memory_space<vmem>>, vector<8x128xf32>
    tpu.vector_store %arg9[%c0_14, %c0_15], %15 {strides = array<i32>} : memref<8x128xf32, #tpu.memory_space<vmem>>, vector<8x128xf32>,
    %c0_16 = arith.constant 0 : index
    %c0_17 = arith.constant 0 : index
    %17 = vector.load %arg6[%c0_16, %c0_17] : memref<128x128xf32, #tpu.memory_space<vmem>>, vector<128x128xf32>
    %cst_18 = arith.constant dense<0.000000e+00> : vector<8x128xf32>
    %18 = tpu.matmul %15, %17, %cst_18 {dimension_numbers = #tpu.dot_dimension_numbers<[1], [0], [0], [1], [0, 0, 1, 1], [], []>} : vector<8x128xf32>, vector<128x128xf32>, vector<8x128xf32> -> vector<8x128xf32>
    %c0_19 = arith.constant 0 : index
    %c0_20 = arith.constant 0 : index
    %19 = vector.load %arg7[%c0_19, %c0_20] : memref<1x128xf32, #tpu.memory_space<vmem>>, vector<1x128xf32>
    %20 = vector.broadcast %19 : vector<1x128xf32> to vector<8x128xf32>
    %21 = arith.addf %18, %20 : vector<8x128xf32>
    %c0_21 = arith.constant 0 : index
    %c0_22 = arith.constant 0 : index
    %22 = vector.load %arg10[%c0_21, %c0_22] : memref<8x128xf32, #tpu.memory_space<vmem>>, vector<8x128xf32>
    tpu.vector_store %arg10[%c0_21, %c0_22], %21 {strides = array<i32>} : memref<8x128xf32, #tpu.memory_space<vmem>>, vector<8x128xf32>,
    return
  }
  func.func @transform_0(%arg0: i32) -> (i32, i32) {
    %c0_i32 = arith.constant 0 : i32
    %c0_i32_0 = arith.constant 0 : i32
    return %arg0, %c0_i32 : i32, i32
  }
  func.func @transform_1(%arg0: i32) -> (i32, i32) {
    %c0_i32 = arith.constant 0 : i32
    %c0_i32_0 = arith.constant 0 : i32
    %c0_i32_1 = arith.constant 0 : i32
    return %c0_i32, %c0_i32_0 : i32, i32
  }
  func.func @transform_2(%arg0: i32) -> (i32, i32) {
    %c0_i32 = arith.constant 0 : i32
    %c0_i32_0 = arith.constant 0 : i32
    %c0_i32_1 = arith.constant 0 : i32
    return %c0_i32, %c0_i32_0 : i32, i32
  }
  func.func @transform_3(%arg0: i32) -> (i32, i32) {
    %c0_i32 = arith.constant 0 : i32
    %c0_i32_0 = arith.constant 0 : i32
    %c0_i32_1 = arith.constant 0 : i32
    return %c0_i32, %c0_i32_0 : i32, i32
  }
  func.func @transform_4(%arg0: i32) -> (i32, i32) {
    %c0_i32 = arith.constant 0 : i32
    %c0_i32_0 = arith.constant 0 : i32
    %c0_i32_1 = arith.constant 0 : i32
    return %c0_i32, %c0_i32_0 : i32, i32
  }
  func.func @transform_5(%arg0: i32) -> (i32, i32) {
    %c0_i32 = arith.constant 0 : i32
    %c0_i32_0 = arith.constant 0 : i32
    %c0_i32_1 = arith.constant 0 : i32
    return %c0_i32, %c0_i32_0 : i32, i32
  }
  func.func @transform_6(%arg0: i32) -> (i32, i32) {
    %c0_i32 = arith.constant 0 : i32
    %c0_i32_0 = arith.constant 0 : i32
    %c0_i32_1 = arith.constant 0 : i32
    return %c0_i32, %c0_i32_0 : i32, i32
  }
  func.func @transform_7(%arg0: i32) -> (i32, i32) {
    %c0_i32 = arith.constant 0 : i32
    %c0_i32_0 = arith.constant 0 : i32
    return %arg0, %c0_i32 : i32, i32
  }
  func.func @transform_8(%arg0: i32) -> (i32, i32) {
    %c0_i32 = arith.constant 0 : i32
    %c0_i32_0 = arith.constant 0 : i32
    return %arg0, %c0_i32 : i32, i32
  }
  func.func @transform_9(%arg0: i32) -> (i32, i32) {
    %c0_i32 = arith.constant 0 : i32
    %c0_i32_0 = arith.constant 0 : i32
    return %arg0, %c0_i32 : i32, i32
  }
}

</mosaic_0001>

<llo_original>
// kernel: tpu_custom_call.1
$region0: #{tpu_custom_call.1}
  #allocation0 [shape = 'u32[]', space=smem, size = 0x4, offset = 0x4, fixed_abs, tag = 'smem constant byte address 0x4 - core index']
  #allocation1 [shape = 'u32[72,128]{1,0:T(1,128)}', space=vmem, size = 0x9000, scoped, tag = 'internal scratch']
  %s0 = inlined_call_operand.hbm [shape: f32[8,128], index: 0, kind: input, shape index: {}]
  %s1 = inlined_call_operand.hbm [shape: f32[128,128], index: 1, kind: input, shape index: {}]
  %s2 = inlined_call_operand.vmem [shape: f32[1,128], index: 2, kind: input, shape index: {}]
  %s3 = inlined_call_operand.hbm [shape: f32[128,128], index: 3, kind: input, shape index: {}]
  %s4 = inlined_call_operand.vmem [shape: f32[1,128], index: 4, kind: input, shape index: {}]
  %s5 = inlined_call_operand.hbm [shape: f32[128,128], index: 5, kind: input, shape index: {}]
  %s6 = inlined_call_operand.vmem [shape: f32[1,128], index: 6, kind: input, shape index: {}]
  %s7 = inlined_call_operand.hbm [shape: f32[8,128], index: 7, kind: output, shape index: {0}]
  %s8 = inlined_call_operand.hbm [shape: f32[8,128], index: 8, kind: output, shape index: {1}]
  %s9 = inlined_call_operand.hbm [shape: f32[8,128], index: 9, kind: output, shape index: {2}]
  %10 = xla_tuple %s7, %s8, %s9
  %s11 = sld [smem:[#allocation0]]
  $region70: #{tpu_custom_call.1} parent=0
    _
  %s13 = ssub.s32 1, %s11
  %s14 = scalar_select 0, %s13, %s11
  $region1: #{tpu_custom_call.1} parent=0
    #allocation2 [shape = 'u8[4096]{0}', space=vmem, size = 0x1000, scoped, tag = 'input window, operand 0, single buffered']
    #allocation3 [shape = 's32[1]{0}', space=sflag, size = 0x4, scoped, tag = 'scoped memory for tpu_custom_call.1']
    #allocation4 [shape = 's32[1]{0}', space=sflag, size = 0x4, scoped, tag = 'scoped memory for tpu_custom_call.1']
    #allocation5 [shape = 'u8[65536]{0}', space=vmem, size = 0x10000, scoped, tag = 'input window, operand 1, single buffered']
    #allocation6 [shape = 's32[1]{0}', space=sflag, size = 0x4, scoped, tag = 'scoped memory for tpu_custom_call.1']
    #allocation7 [shape = 'u8[65536]{0}', space=vmem, size = 0x10000, scoped, tag = 'input window, operand 3, single buffered']
    #allocation8 [shape = 'u8[65536]{0}', space=vmem, size = 0x10000, scoped, tag = 'input window, operand 5, single buffered']
    #allocation9 [shape = 's32[1]{0}', space=sflag, size = 0x4, scoped, tag = 'scoped memory for tpu_custom_call.1']
    #allocation10 [shape = 'u8[4096]{0}', space=vmem, size = 0x1000, scoped, tag = 'output window, operand 0, single buffered']
    #allocation11 [shape = 'u8[4096]{0}', space=vmem, size = 0x1000, scoped, tag = 'output window, operand 1, single buffered']
    #allocation12 [shape = 's32[1]{0}', space=sflag, size = 0x4, scoped, tag = 'scoped memory for tpu_custom_call.1']
    #allocation13 [shape = 'u8[4096]{0}', space=vmem, size = 0x1000, scoped, tag = 'output window, operand 2, single buffered']
    %15 = vsyncpa [#allocation3], 0
    %16 = vsyncpa [#allocation6], 0
    %17 = vsyncpa [#allocation9], 0
    %18 = vsyncpa [#allocation4], 0
    %19 = vsyncpa [#allocation12], 0
    // Predicated region
    $region2: #{tpu_custom_call.1} parent=1 // pred_check
      _
    $region3: #{tpu_custom_call.1} parent=1 // pred_check_branch
      %21 = sbr.rel (0) target = $region5
    $region4: #{tpu_custom_call.1} parent=1 // pred_region
      %23 = vsyncadd [#allocation3], 0
      %s25 = sshll.u32 %s0, 4
      %s26 = int_to_ptr.hbm [resolvable:$true] %s25
      %s27 = sshll.u32 [#allocation2], 4
      %s28 = int_to_ptr.vmem [resolvable:$true] %s27
      %30 = dma.hbm_to_vmem [thread:$0]  %s26, 128, %s28, [#allocation3]
    $region5: #{tpu_custom_call.1} parent=1 // pred_fallthru
      _
    // Predicated region
    $region6: #{tpu_custom_call.1} parent=1 // pred_check
      _
    $region7: #{tpu_custom_call.1} parent=1 // pred_check_branch
      %32 = sbr.rel (0) target = $region9
    $region8: #{tpu_custom_call.1} parent=1 // pred_region
      %34 = vsyncadd [#allocation6], 0
      %s35 = sshll.u32 %s1, 4
      %s36 = int_to_ptr.hbm [resolvable:$true] %s35
      %s37 = sshll.u32 [#allocation5], 4
      %s38 = int_to_ptr.vmem [resolvable:$true] %s37
      %43 = dma.hbm_to_vmem [thread:$0]  %s36, 2048, %s38, [#allocation6], 128, 128, 8
    $region9: #{tpu_custom_call.1} parent=1 // pred_fallthru
      _
    // Predicated region
    $region10: #{tpu_custom_call.1} parent=1 // pred_check
      _
    $region11: #{tpu_custom_call.1} parent=1 // pred_check_branch
      %45 = sbr.rel (0) target = $region13
    $region12: #{tpu_custom_call.1} parent=1 // pred_region
      _
    $region13: #{tpu_custom_call.1} parent=1 // pred_fallthru
      _
    // Predicated region
    $region14: #{tpu_custom_call.1} parent=1 // pred_check
      _
    $region15: #{tpu_custom_call.1} parent=1 // pred_check_branch
      %47 = sbr.rel (0) target = $region17
    $region16: #{tpu_custom_call.1} parent=1 // pred_region
      %49 = vsyncadd [#allocation6], 0
      %s50 = sshll.u32 %s3, 4
      %s51 = int_to_ptr.hbm [resolvable:$true] %s50
      %s52 = sshll.u32 [#allocation7], 4
      %s53 = int_to_ptr.vmem [resolvable:$true] %s52
      %58 = dma.hbm_to_vmem [thread:$0]  %s51, 2048, %s53, [#allocation6], 128, 128, 8
    $region17: #{tpu_custom_call.1} parent=1 // pred_fallthru
      _
    // Predicated region
    $region18: #{tpu_custom_call.1} parent=1 // pred_check
      _
    $region19: #{tpu_custom_call.1} parent=1 // pred_check_branch
      %60 = sbr.rel (0) target = $region21
    $region20: #{tpu_custom_call.1} parent=1 // pred_region
      _
    $region21: #{tpu_custom_call.1} parent=1 // pred_fallthru
      _
    // Predicated region
    $region22: #{tpu_custom_call.1} parent=1 // pred_check
      _
    $region23: #{tpu_custom_call.1} parent=1 // pred_check_branch
      %62 = sbr.rel (0) target = $region25
    $region24: #{tpu_custom_call.1} parent=1 // pred_region
      %64 = vsyncadd [#allocation9], 0
      %s65 = sshll.u32 %s5, 4
      %s66 = int_to_ptr.hbm [resolvable:$true] %s65
      %s67 = sshll.u32 [#allocation8], 4
      %s68 = int_to_ptr.vmem [resolvable:$true] %s67
      %73 = dma.hbm_to_vmem [thread:$0]  %s66, 2048, %s68, [#allocation9], 128, 128, 8
    $region25: #{tpu_custom_call.1} parent=1 // pred_fallthru
      _
    // Predicated region
    $region26: #{tpu_custom_call.1} parent=1 // pred_check
      _
    $region27: #{tpu_custom_call.1} parent=1 // pred_check_branch
      %75 = sbr.rel (0) target = $region29
    $region28: #{tpu_custom_call.1} parent=1 // pred_region
      _
    $region29: #{tpu_custom_call.1} parent=1 // pred_fallthru
      _
    // Predicated region
    $region30: #{tpu_custom_call.1} parent=1 // pred_check
      _
    $region31: #{tpu_custom_call.1} parent=1 // pred_check_branch
      %77 = sbr.rel (0) target = $region33
    $region32: #{tpu_custom_call.1} parent=1 // pred_region
      %79 = dma.done [#allocation3], 128
    $region33: #{tpu_custom_call.1} parent=1 // pred_fallthru
      _
    // Predicated region
    $region34: #{tpu_custom_call.1} parent=1 // pred_check
      _
    $region35: #{tpu_custom_call.1} parent=1 // pred_check_branch
      %81 = sbr.rel (0) target = $region37
    $region36: #{tpu_custom_call.1} parent=1 // pred_region
      %83 = dma.done [#allocation6], 2048
    $region37: #{tpu_custom_call.1} parent=1 // pred_fallthru
      _
    // Predicated region
    $region38: #{tpu_custom_call.1} parent=1 // pred_check
      _
    $region39: #{tpu_custom_call.1} parent=1 // pred_check_branch
      %85 = sbr.rel (0) target = $region41
    $region40: #{tpu_custom_call.1} parent=1 // pred_region
      %87 = dma.done [#allocation6], 2048
    $region41: #{tpu_custom_call.1} parent=1 // pred_fallthru
      _
    // Predicated region
    $region42: #{tpu_custom_call.1} parent=1 // pred_check
      _
    $region43: #{tpu_custom_call.1} parent=1 // pred_check_branch
      %89 = sbr.rel (0) target = $region45
    $region44: #{tpu_custom_call.1} parent=1 // pred_region
      %91 = dma.done [#allocation9], 2048
    $region45: #{tpu_custom_call.1} parent=1 // pred_fallthru
      _
    %v92 = vld [vmem:[#allocation2] sm:$0xff]
    %v93 = vld [vmem:[#allocation5] sm:$0xff]
    %v94 = vld [vmem:[#allocation5 + $0x8] sm:$0xff]
    %v95 = vld [vmem:[#allocation5 + $0x10] sm:$0xff]
    %v96 = vld [vmem:[#allocation5 + $0x18] sm:$0xff]
    %v97 = vld [vmem:[#allocation5 + $0x20] sm:$0xff]
    %v98 = vld [vmem:[#allocation5 + $0x28] sm:$0xff]
    %v99 = vld [vmem:[#allocation5 + $0x30] sm:$0xff]
    %v100 = vld [vmem:[#allocation5 + $0x38] sm:$0xff]
    %v101 = vld [vmem:[#allocation5 + $0x40] sm:$0xff]
    %v102 = vld [vmem:[#allocation5 + $0x48] sm:$0xff]
    %v103 = vld [vmem:[#allocation5 + $0x50] sm:$0xff]
    %v104 = vld [vmem:[#allocation5 + $0x58] sm:$0xff]
    %v105 = vld [vmem:[#allocation5 + $0x60] sm:$0xff]
    %v106 = vld [vmem:[#allocation5 + $0x68] sm:$0xff]
    %v107 = vld [vmem:[#allocation5 + $0x70] sm:$0xff]
    %v108 = vld [vmem:[#allocation5 + $0x78] sm:$0xff]
    %v109 = vld [vmem:[%s2] sm:$0x1]
    %v111 = vperm.slane %v109, 0
    %113 = vmatpush.msra.mxu0 %v108
    %114 = vmatpush.msra.mxu0 %v107
    %115 = vmatpush.msra.mxu0 %v106
    %116 = vmatpush.msra.mxu0 %v105
    %117 = vmatpush.msra.mxu0 %v104
    %118 = vmatpush.msra.mxu0 %v103
    %119 = vmatpush.msra.mxu0 %v102
    %120 = vmatpush.msra.mxu0 %v101
    %121 = vmatpush.msra.mxu0 %v100
    %122 = vmatpush.msra.mxu0 %v99
    %123 = vmatpush.msra.mxu0 %v98
    %124 = vmatpush.msra.mxu0 %v97
    %125 = vmatpush.msra.mxu0 %v96
    %126 = vmatpush.msra.mxu0 %v95
    %127 = vmatpush.msra.mxu0 %v94
    %128 = vmatpush.msra.mxu0 %v93
    %129 = vmatmul.f32.gmra.mxu0 %v92
    %v130 = vpop.f32.mrf.mxu0
    %v131 = vadd.f32 %v111, %v130
    %132 = vdwg.mxu0
    %v133 = vmax.f32 %v131, 0.0
    %134 = vst [vmem:[#allocation10] sm:$0xff] %v133
    %v135 = vld [vmem:[#allocation7] sm:$0xff]
    %v136 = vld [vmem:[#allocation7 + $0x8] sm:$0xff]
    %v137 = vld [vmem:[#allocation7 + $0x10] sm:$0xff]
    %v138 = vld [vmem:[#allocation7 + $0x18] sm:$0xff]
    %v139 = vld [vmem:[#allocation7 + $0x20] sm:$0xff]
    %v140 = vld [vmem:[#allocation7 + $0x28] sm:$0xff]
    %v141 = vld [vmem:[#allocation7 + $0x30] sm:$0xff]
    %v142 = vld [vmem:[#allocation7 + $0x38] sm:$0xff]
    %v143 = vld [vmem:[#allocation7 + $0x40] sm:$0xff]
    %v144 = vld [vmem:[#allocation7 + $0x48] sm:$0xff]
    %v145 = vld [vmem:[#allocation7 + $0x50] sm:$0xff]
    %v146 = vld [vmem:[#allocation7 + $0x58] sm:$0xff]
    %v147 = vld [vmem:[#allocation7 + $0x60] sm:$0xff]
    %v148 = vld [vmem:[#allocation7 + $0x68] sm:$0xff]
    %v149 = vld [vmem:[#allocation7 + $0x70] sm:$0xff]
    %v150 = vld [vmem:[#allocation7 + $0x78] sm:$0xff]
    %v151 = vld [vmem:[%s4] sm:$0x1]
    %v153 = vperm.slane %v151, 0
    %155 = vmatpush.msra.mxu0 %v150
    %156 = vmatpush.msra.mxu0 %v149
    %157 = vmatpush.msra.mxu0 %v148
    %158 = vmatpush.msra.mxu0 %v147
    %159 = vmatpush.msra.mxu0 %v146
    %160 = vmatpush.msra.mxu0 %v145
    %161 = vmatpush.msra.mxu0 %v144
    %162 = vmatpush.msra.mxu0 %v143
    %163 = vmatpush.msra.mxu0 %v142
    %164 = vmatpush.msra.mxu0 %v141
    %165 = vmatpush.msra.mxu0 %v140
    %166 = vmatpush.msra.mxu0 %v139
    %167 = vmatpush.msra.mxu0 %v138
    %168 = vmatpush.msra.mxu0 %v137
    %169 = vmatpush.msra.mxu0 %v136
    %170 = vmatpush.msra.mxu0 %v135
    %171 = vmatmul.f32.gmra.mxu0 %v133
    %v172 = vpop.f32.mrf.mxu0
    %v173 = vadd.f32 %v153, %v172
    %174 = vdwg.mxu0
    %v175 = vmax.f32 %v173, 0.0
    %176 = vst [vmem:[#allocation11] sm:$0xff] %v175
    %v177 = vld [vmem:[#allocation8] sm:$0xff]
    %v178 = vld [vmem:[#allocation8 + $0x8] sm:$0xff]
    %v179 = vld [vmem:[#allocation8 + $0x10] sm:$0xff]
    %v180 = vld [vmem:[#allocation8 + $0x18] sm:$0xff]
    %v181 = vld [vmem:[#allocation8 + $0x20] sm:$0xff]
    %v182 = vld [vmem:[#allocation8 + $0x28] sm:$0xff]
    %v183 = vld [vmem:[#allocation8 + $0x30] sm:$0xff]
    %v184 = vld [vmem:[#allocation8 + $0x38] sm:$0xff]
    %v185 = vld [vmem:[#allocation8 + $0x40] sm:$0xff]
    %v186 = vld [vmem:[#allocation8 + $0x48] sm:$0xff]
    %v187 = vld [vmem:[#allocation8 + $0x50] sm:$0xff]
    %v188 = vld [vmem:[#allocation8 + $0x58] sm:$0xff]
    %v189 = vld [vmem:[#allocation8 + $0x60] sm:$0xff]
    %v190 = vld [vmem:[#allocation8 + $0x68] sm:$0xff]
    %v191 = vld [vmem:[#allocation8 + $0x70] sm:$0xff]
    %v192 = vld [vmem:[#allocation8 + $0x78] sm:$0xff]
    %v193 = vld [vmem:[%s6] sm:$0x1]
    %v195 = vperm.slane %v193, 0
    %197 = vmatpush.msra.mxu0 %v192
    %198 = vmatpush.msra.mxu0 %v191
    %199 = vmatpush.msra.mxu0 %v190
    %200 = vmatpush.msra.mxu0 %v189
    %201 = vmatpush.msra.mxu0 %v188
    %202 = vmatpush.msra.mxu0 %v187
    %203 = vmatpush.msra.mxu0 %v186
    %204 = vmatpush.msra.mxu0 %v185
    %205 = vmatpush.msra.mxu0 %v184
    %206 = vmatpush.msra.mxu0 %v183
    %207 = vmatpush.msra.mxu0 %v182
    %208 = vmatpush.msra.mxu0 %v181
    %209 = vmatpush.msra.mxu0 %v180
    %210 = vmatpush.msra.mxu0 %v179
    %211 = vmatpush.msra.mxu0 %v178
    %212 = vmatpush.msra.mxu0 %v177
    %213 = vmatmul.f32.gmra.mxu0 %v175
    %v214 = vpop.f32.mrf.mxu0
    %v215 = vadd.f32 %v195, %v214
    %216 = vdwg.mxu0
    %217 = vst [vmem:[#allocation13] sm:$0xff] %v215
    // Predicated region
    $region46: #{tpu_custom_call.1} parent=1 // pred_check
      _
    $region47: #{tpu_custom_call.1} parent=1 // pred_check_branch
      %219 = sbr.rel (0) target = $region49
    $region48: #{tpu_custom_call.1} parent=1 // pred_region
      %221 = vsyncadd [#allocation4], 0
      %s223 = sshll.u32 [#allocation10], 4
      %s224 = int_to_ptr.vmem [resolvable:$true] %s223
      %s225 = sshll.u32 %s7, 4
      %s226 = int_to_ptr.hbm [resolvable:$true] %s225
      %228 = dma.vmem_to_hbm [thread:$0]  %s224, 128, %s226, [#allocation4]
    $region49: #{tpu_custom_call.1} parent=1 // pred_fallthru
      _
    // Predicated region
    $region50: #{tpu_custom_call.1} parent=1 // pred_check
      _
    $region51: #{tpu_custom_call.1} parent=1 // pred_check_branch
      %230 = sbr.rel (0) target = $region53
    $region52: #{tpu_custom_call.1} parent=1 // pred_region
      %232 = vsyncadd [#allocation12], 0
      %s234 = sshll.u32 [#allocation11], 4
      %s235 = int_to_ptr.vmem [resolvable:$true] %s234
      %s236 = sshll.u32 %s8, 4
      %s237 = int_to_ptr.hbm [resolvable:$true] %s236
      %239 = dma.vmem_to_hbm [thread:$0]  %s235, 128, %s237, [#allocation12]
    $region53: #{tpu_custom_call.1} parent=1 // pred_fallthru
      _
    // Predicated region
    $region54: #{tpu_custom_call.1} parent=1 // pred_check
      _
    $region55: #{tpu_custom_call.1} parent=1 // pred_check_branch
      %241 = sbr.rel (0) target = $region57
    $region56: #{tpu_custom_call.1} parent=1 // pred_region
      %243 = vsyncadd [#allocation12], 0
      %s245 = sshll.u32 [#allocation13], 4
      %s246 = int_to_ptr.vmem [resolvable:$true] %s245
      %s247 = sshll.u32 %s9, 4
      %s248 = int_to_ptr.hbm [resolvable:$true] %s247
      %250 = dma.vmem_to_hbm [thread:$0]  %s246, 128, %s248, [#allocation12]
    $region57: #{tpu_custom_call.1} parent=1 // pred_fallthru
      _
    // Predicated region
    $region58: #{tpu_custom_call.1} parent=1 // pred_check
      _
    $region59: #{tpu_custom_call.1} parent=1 // pred_check_branch
      %252 = sbr.rel (0) target = $region61
    $region60: #{tpu_custom_call.1} parent=1 // pred_region
      %254 = dma.done [#allocation4], 128
    $region61: #{tpu_custom_call.1} parent=1 // pred_fallthru
      _
    // Predicated region
    $region62: #{tpu_custom_call.1} parent=1 // pred_check
      _
    $region63: #{tpu_custom_call.1} parent=1 // pred_check_branch
      %256 = sbr.rel (0) target = $region65
    $region64: #{tpu_custom_call.1} parent=1 // pred_region
      %258 = dma.done [#allocation12], 128
    $region65: #{tpu_custom_call.1} parent=1 // pred_fallthru
      _
    // Predicated region
    $region66: #{tpu_custom_call.1} parent=1 // pred_check
      _
    $region67: #{tpu_custom_call.1} parent=1 // pred_check_branch
      %260 = sbr.rel (0) target = $region69
    $region68: #{tpu_custom_call.1} parent=1 // pred_region
      %262 = dma.done [#allocation12], 128
    $region69: #{tpu_custom_call.1} parent=1 // pred_fallthru
      _
    %263 = vsyncpa [#allocation3], 1
    %264 = vsyncpa [#allocation6], 1
    %265 = vsyncpa [#allocation9], 1
    %266 = vsyncpa [#allocation4], 1
    %267 = vsyncpa [#allocation12], 1

</llo_original>
